<compile_context>
chip_gen: v7x
topology: tpu7x:2x2x1
jax: 0.10.0
libtpu: 0.0.40
codegen_flags: <defaults>
</compile_context>

<pallas_src>
import functools

import jax
import jax.numpy as jnp
from jax import lax
from jax.experimental import pallas as pl
from jax.experimental.pallas import tpu as pltpu

_NEG_BIG = -1e30  # large finite negative; avoids exp(-inf - -inf) = NaN


def _cdiv(a, b):
    return (a + b - 1) // b


def _round_up(x, m):
    return (x + m - 1) // m * m


@functools.lru_cache(maxsize=None)
def _chip_vmem_bytes():
    """Physical VMEM per TensorCore; conservative (v7x) fallback."""
    try:
        return int(pltpu.get_tpu_info().vmem_capacity_bytes)
    except Exception:
        return 64 << 20


def _chip_defaults(itemsize):
    """(tb_cap, tc_cap, vmem_limit_bytes) per TPU generation."""
    vmem = _chip_vmem_bytes()
    if vmem >= (100 << 20):                      # v5e / v6e: 128 MiB VMEM
        return 512, 4096, (64 << 20)
    # v7x: 64 MiB VMEM, ~3.2 TB/s HBM -> keep the f32 footprint lean.
    return 512, (4096 if itemsize <= 2 else 2048), (48 << 20)


def _make_ce_kernel(has_weights, num_classes, tc, mask_c):
    """Kernel factory; all arguments are static (baked into the trace)."""

    def kernel(logits_ref, target_ref, *rest):
        if has_weights:
            weights_ref, loss_ref, m_sc, l_sc, p_sc = rest
        else:
            weights_ref = None
            loss_ref, m_sc, l_sc, p_sc = rest

        c = pl.program_id(1)
        nc = pl.num_programs(1)

        @pl.when(c == 0)
        def _():
            m_sc[...] = jnp.full(m_sc.shape, _NEG_BIG, jnp.float32)
            l_sc[...] = jnp.zeros(l_sc.shape, jnp.float32)
            p_sc[...] = jnp.zeros(p_sc.shape, jnp.float32)

        x = logits_ref[...].astype(jnp.float32)            # (TB, TC)
        tb, tc_blk = x.shape

        # Unshifted lane index — shared by the ragged-tail mask and the
        # picked-class compare (no full-tile '+ c*TC' add).
        col = lax.broadcasted_iota(jnp.int32, (tb, tc_blk), 1)

        if mask_c:
            # Only the last class tile has < TC valid lanes; a scalar limit
            # plus one compare/select masks them to a large finite negative.
            limit = num_classes - c * tc                   # scalar int32
            x = jnp.where(col < limit, x, _NEG_BIG)

        # Online logsumexp over the class axis (EUP exp + XLU lane-reduce).
        m_prev = m_sc[...]
        m_new = jnp.maximum(m_prev, jnp.max(x, axis=1, keepdims=True))
        alpha = jnp.exp(m_prev - m_new)
        l_sc[...] = alpha * l_sc[...] + jnp.sum(jnp.exp(x - m_new), axis=1,
                                                keepdims=True)
        m_sc[...] = m_new

        # picked[i] = logits[i, target[i]]: compare the unshifted lane iota
        # against the per-row LOCAL target (a (TB,1) subtract, not a full-tile
        # add).  Out-of-range lanes can never match a valid target.
        tgt_local = target_ref[...] - c * tc               # (TB, 1) int32
        p_sc[...] += jnp.sum(jnp.where(col == tgt_local, x, 0.0), axis=1,
                             keepdims=True)

        @pl.when(c == nc - 1)
        def _():
            loss = m_sc[...] + jnp.log(l_sc[...]) - p_sc[...]
            if has_weights:
                loss = loss * weights_ref[...].astype(jnp.float32)
            loss_ref[...] = loss

    return kernel


@functools.partial(jax.jit,
                   static_argnames=("aggregate", "tb", "tc", "vmem_limit"))
def _ce_pallas(logits, target2d, weights2d, *, aggregate, tb, tc, vmem_limit):
    B, C = logits.shape
    nb, nc = _cdiv(B, tb), _cdiv(C, tc)
    mask_c = (nc > 1) and (C % tc != 0)
    has_weights = weights2d is not None

    in_specs = [
        pl.BlockSpec((tb, tc), lambda b, c: (b, c)),       # logits tile
        pl.BlockSpec((tb, 1), lambda b, c: (b, 0)),        # targets (const in c)
    ]
    operands = [logits, target2d]
    if has_weights:
        in_specs.append(pl.BlockSpec((tb, 1), lambda b, c: (b, 0)))
        operands.append(weights2d)

    loss2d = pl.pallas_call(
        _make_ce_kernel(has_weights, C, tc, mask_c),
        out_shape=jax.ShapeDtypeStruct((B, 1), jnp.float32),
        grid_spec=pltpu.PrefetchScalarGridSpec(
            num_scalar_prefetch=0,
            grid=(nb, nc),
            in_specs=in_specs,
            out_specs=pl.BlockSpec((tb, 1), lambda b, c: (b, 0)),
            scratch_shapes=[pltpu.VMEM((tb, 1), jnp.float32)] * 3,
        ),
        compiler_params=pltpu.CompilerParams(
            dimension_semantics=("parallel", "arbitrary"),
            vmem_limit_bytes=vmem_limit,
        ),
    )(*operands)

    loss = loss2d[:, 0]
    if aggregate == "sum":
        return jnp.sum(loss)
    if aggregate == "mean":
        # Module semantics: plain .mean() of the (weighted) loss vector,
        # i.e. divide by the batch size B (not by sum of weights).
        return jnp.mean(loss)
    return loss


def cross_entropy_loss(logits, target, weights=None, aggregate="mean",
                       block_b=None, block_c=None):
    """Pallas implementation of the PyTorch CrossEntropyLoss module forward."""
    assert aggregate in ("sum", "mean", None)
    B, C = logits.shape
    if target.ndim == 2:
        target = target[:, 0]
    target2d = target.astype(jnp.int32).reshape(B, 1)
    weights2d = (None if weights is None
                 else weights.astype(jnp.float32).reshape(B, 1))

    itemsize = jnp.dtype(logits.dtype).itemsize
    d_tb, d_tc, vmem_limit = _chip_defaults(itemsize)
    tb_cap = d_tb if block_b is None else block_b
    tc_cap = d_tc if block_c is None else block_c

    # Full-extent blocks are always legal; otherwise tiles must be multiples
    # of (8, 128).  Ragged edges are handled in-kernel, never padded in HBM.
    TB = B if B <= tb_cap else min(B, max(8, (tb_cap // 8) * 8))
    TC = C if C <= tc_cap else min(C, max(128, (tc_cap // 128) * 128))
    nb, nc = _cdiv(B, TB), _cdiv(C, TC)

    # v7x megacore: if every row lands in one batch tile but there is real
    # class-axis work, split the batch so both TensorCores get work.
    if nb == 1 and nc >= 2 and B >= 16:
        TB = _round_up(_cdiv(B, 2), 8)

    return _ce_pallas(logits, target2d, weights2d, aggregate=aggregate,
                      tb=TB, tc=TC, vmem_limit=vmem_limit)


def _reference(logits, target, weights=None, aggregate="mean"):
    x = logits.astype(jnp.float32)
    lse = jax.nn.logsumexp(x, axis=1)
    picked = jnp.take_along_axis(x, target[:, None], axis=1)[:, 0]
    loss = lse - picked
    if weights is not None:
        loss = loss * weights
    if aggregate == "sum":
        return loss.sum()
    if aggregate == "mean":
        return loss.mean()
    return loss


if __name__ == "__main__":
    key = jax.random.PRNGKey(0)
    k1, k2, k3, k4, k5, k6, k7 = jax.random.split(key, 7)

    # --- small shapes consistent with the module: batch=8, num_classes=32 ---
    B, C = 8, 32
    logits = jax.random.normal(k1, (B, C), jnp.float32)
    target = jax.random.randint(k2, (B,), 0, C, jnp.int32)
    weights = jax.random.uniform(k3, (B,), jnp.float32) + 0.5

    out = jax.block_until_ready(
        cross_entropy_loss(logits, target, weights, aggregate="mean"))
    ref = _reference(logits, target, weights, "mean")
    assert jnp.allclose(out, ref, atol=1e-5, rtol=1e-5), (out, ref)

    vec = jax.block_until_ready(
        cross_entropy_loss(logits, target, None, aggregate=None))
    assert jnp.allclose(vec, _reference(logits, target, None, None),
                        atol=1e-5, rtol=1e-5)

    s = jax.block_until_ready(
        cross_entropy_loss(logits, target, weights, aggregate="sum"))
    assert jnp.allclose(s, _reference(logits, target, weights, "sum"),
                        atol=1e-5, rtol=1e-5)

    # --- tiled / online-logsumexp path with ragged B AND ragged C (no HBM
    #     padding anymore): 3 batch tiles (last partial), 3 class tiles
    #     (last masked in-kernel), bf16 fed natively ---
    B2, C2 = 20, 300
    logits2 = jax.random.normal(k4, (B2, C2), jnp.float32).astype(jnp.bfloat16)
    target2 = jax.random.randint(k5, (B2,), 0, C2, jnp.int32)
    out2 = jax.block_until_ready(
        cross_entropy_loss(logits2, target2, None, aggregate="mean",
                           block_b=8, block_c=128))
    ref2 = _reference(logits2, target2, None, "mean")
    assert jnp.allclose(out2, ref2, atol=2e-3, rtol=2e-3), (out2, ref2)

    # --- exercise the megacore batch-split path (nb==1 -> split to 2 tiles)
    #     plus the weighted vector output on the ragged-C tiled path ---
    B3, C3 = 16, 300
    logits3 = jax.random.normal(k6, (B3, C3), jnp.float32)
    target3 = jax.random.randint(k7, (B3,), 0, C3, jnp.int32)
    weights3 = jnp.linspace(0.5, 1.5, B3, dtype=jnp.float32)
    out3 = jax.block_until_ready(
        cross_entropy_loss(logits3, target3, weights3, aggregate=None,
                           block_c=128))
    ref3 = _reference(logits3, target3, weights3, None)
    assert jnp.allclose(out3, ref3, atol=1e-4, rtol=1e-4), (out3, ref3)

    print("KERNEL_OK")
</pallas_src>

<mosaic_0001>
module attributes {stable_mosaic.version = 11 : i64} {
  func.func @kernel(%arg0: i32, %arg1: i32, %arg2: memref<8x32xf32, #tpu.memory_space<vmem>>, %arg3: memref<8x1xi32, #tpu.memory_space<vmem>>, %arg4: memref<8x1xf32, #tpu.memory_space<vmem>>, %arg5: memref<8x1xf32, #tpu.memory_space<vmem>>, %arg6: memref<8x1xf32, #tpu.memory_space<vmem>>, %arg7: memref<8x1xf32, #tpu.memory_space<vmem>>, %arg8: memref<8x1xf32, #tpu.memory_space<vmem>>) attributes {dimension_semantics = [#tpu.dimension_semantics<parallel>, #tpu.dimension_semantics<arbitrary>], iteration_bounds = array<i64: 1, 1>, scalar_prefetch = 0 : i64, scratch_operands = 3 : i64, tpu.core_type = #tpu.core_type<tc>, window_params = [{transform_indices = @transform_0, window_bounds = array<i64: 8, 32>}, {transform_indices = @transform_1, window_bounds = array<i64: 8, 1>}, {transform_indices = @transform_2, window_bounds = array<i64: 8, 1>}, {transform_indices = @transform_3, window_bounds = array<i64: 8, 1>}]} {
    %c0_i32 = arith.constant 0 : i32
    %0 = arith.cmpi eq, %arg1, %c0_i32 : i32
    %1 = arith.extui %0 : i1 to i32
    %c0_i32_0 = arith.constant 0 : i32
    %2 = arith.cmpi ne, %1, %c0_i32_0 : i32
    scf.if %2 {
      %cst_21 = arith.constant -1.000000e+30 : f32
      %37 = vector.broadcast %cst_21 : f32 to vector<8x1xf32>
      %c0_22 = arith.constant 0 : index
      %c0_23 = arith.constant 0 : index
      %38 = vector.load %arg6[%c0_22, %c0_23] : memref<8x1xf32, #tpu.memory_space<vmem>>, vector<8x1xf32>
      tpu.vector_store %arg6[%c0_22, %c0_23], %37 {strides = array<i32>} : memref<8x1xf32, #tpu.memory_space<vmem>>, vector<8x1xf32>,
      %cst_24 = arith.constant 0.000000e+00 : f32
      %39 = vector.broadcast %cst_24 : f32 to vector<8x1xf32>
      %c0_25 = arith.constant 0 : index
      %c0_26 = arith.constant 0 : index
      %40 = vector.load %arg7[%c0_25, %c0_26] : memref<8x1xf32, #tpu.memory_space<vmem>>, vector<8x1xf32>
      tpu.vector_store %arg7[%c0_25, %c0_26], %39 {strides = array<i32>} : memref<8x1xf32, #tpu.memory_space<vmem>>, vector<8x1xf32>,
      %cst_27 = arith.constant 0.000000e+00 : f32
      %41 = vector.broadcast %cst_27 : f32 to vector<8x1xf32>
      %c0_28 = arith.constant 0 : index
      %c0_29 = arith.constant 0 : index
      %42 = vector.load %arg8[%c0_28, %c0_29] : memref<8x1xf32, #tpu.memory_space<vmem>>, vector<8x1xf32>
      tpu.vector_store %arg8[%c0_28, %c0_29], %41 {strides = array<i32>} : memref<8x1xf32, #tpu.memory_space<vmem>>, vector<8x1xf32>,
    } else {
    }
    %c0 = arith.constant 0 : index
    %c0_1 = arith.constant 0 : index
    %3 = vector.load %arg2[%c0, %c0_1] : memref<8x32xf32, #tpu.memory_space<vmem>>, vector<8x32xf32>
    %4 = tpu.iota {dimensions = array<i32: 1>} : vector<8x32xi32>
    %c0_2 = arith.constant 0 : index
    %c0_3 = arith.constant 0 : index
    %5 = vector.load %arg6[%c0_2, %c0_3] : memref<8x1xf32, #tpu.memory_space<vmem>>, vector<8x1xf32>
    %cst = arith.constant dense<0xFF800000> : vector<8xf32>
    %6 = vector.multi_reduction <maximumf>, %3, %cst [1] : vector<8x32xf32> to vector<8xf32>
    %7 = vector.shape_cast %6 : vector<8xf32> to vector<8x1xf32>
    %8 = arith.maximumf %5, %7 : vector<8x1xf32>
    %9 = arith.subf %5, %8 : vector<8x1xf32>
    %10 = math.exp %9 : vector<8x1xf32>
    %c0_4 = arith.constant 0 : index
    %c0_5 = arith.constant 0 : index
    %11 = vector.load %arg7[%c0_4, %c0_5] : memref<8x1xf32, #tpu.memory_space<vmem>>, vector<8x1xf32>
    %12 = arith.mulf %10, %11 : vector<8x1xf32>
    %13 = vector.broadcast %8 : vector<8x1xf32> to vector<8x32xf32>
    %14 = arith.subf %3, %13 : vector<8x32xf32>
    %15 = math.exp %14 : vector<8x32xf32>
    %cst_6 = arith.constant dense<0.000000e+00> : vector<8xf32>
    %16 = vector.multi_reduction <add>, %15, %cst_6 [1] : vector<8x32xf32> to vector<8xf32>
    %17 = vector.shape_cast %16 : vector<8xf32> to vector<8x1xf32>
    %18 = arith.addf %12, %17 : vector<8x1xf32>
    %c0_7 = arith.constant 0 : index
    %c0_8 = arith.constant 0 : index
    %19 = vector.load %arg7[%c0_7, %c0_8] : memref<8x1xf32, #tpu.memory_space<vmem>>, vector<8x1xf32>
    tpu.vector_store %arg7[%c0_7, %c0_8], %18 {strides = array<i32>} : memref<8x1xf32, #tpu.memory_space<vmem>>, vector<8x1xf32>,
    %c0_9 = arith.constant 0 : index
    %c0_10 = arith.constant 0 : index
    %20 = vector.load %arg6[%c0_9, %c0_10] : memref<8x1xf32, #tpu.memory_space<vmem>>, vector<8x1xf32>
    tpu.vector_store %arg6[%c0_9, %c0_10], %8 {strides = array<i32>} : memref<8x1xf32, #tpu.memory_space<vmem>>, vector<8x1xf32>,
    %c0_11 = arith.constant 0 : index
    %c0_12 = arith.constant 0 : index
    %21 = vector.load %arg3[%c0_11, %c0_12] : memref<8x1xi32, #tpu.memory_space<vmem>>, vector<8x1xi32>
    %c32_i32 = arith.constant 32 : i32
    %22 = arith.muli %arg1, %c32_i32 : i32
    %23 = vector.broadcast %22 : i32 to vector<8x1xi32>
    %24 = arith.subi %21, %23 : vector<8x1xi32>
    %c0_13 = arith.constant 0 : index
    %c0_14 = arith.constant 0 : index
    %25 = vector.load %arg8[%c0_13, %c0_14] : memref<8x1xf32, #tpu.memory_space<vmem>>, vector<8x1xf32>
    %26 = vector.broadcast %24 : vector<8x1xi32> to vector<8x32xi32>
    %27 = arith.cmpi eq, %4, %26 : vector<8x32xi32>
    %cst_15 = arith.constant 0.000000e+00 : f32
    %28 = vector.broadcast %cst_15 : f32 to vector<8x32xf32>
    %29 = arith.select %27, %3, %28 : vector<8x32xi1>, vector<8x32xf32>
    %cst_16 = arith.constant dense<0.000000e+00> : vector<8xf32>
    %30 = vector.multi_reduction <add>, %29, %cst_16 [1] : vector<8x32xf32> to vector<8xf32>
    %31 = vector.shape_cast %30 : vector<8xf32> to vector<8x1xf32>
    %32 = arith.addf %25, %31 : vector<8x1xf32>
    %c0_17 = arith.constant 0 : index
    %c0_18 = arith.constant 0 : index
    %33 = vector.load %arg8[%c0_17, %c0_18] : memref<8x1xf32, #tpu.memory_space<vmem>>, vector<8x1xf32>
    tpu.vector_store %arg8[%c0_17, %c0_18], %32 {strides = array<i32>} : memref<8x1xf32, #tpu.memory_space<vmem>>, vector<8x1xf32>,
    %c0_i32_19 = arith.constant 0 : i32
    %34 = arith.cmpi eq, %arg1, %c0_i32_19 : i32
    %35 = arith.extui %34 : i1 to i32
    %c0_i32_20 = arith.constant 0 : i32
    %36 = arith.cmpi ne, %35, %c0_i32_20 : i32
    scf.if %36 {
      %c0_21 = arith.constant 0 : index
      %c0_22 = arith.constant 0 : index
      %37 = vector.load %arg6[%c0_21, %c0_22] : memref<8x1xf32, #tpu.memory_space<vmem>>, vector<8x1xf32>
      %c0_23 = arith.constant 0 : index
      %c0_24 = arith.constant 0 : index
      %38 = vector.load %arg7[%c0_23, %c0_24] : memref<8x1xf32, #tpu.memory_space<vmem>>, vector<8x1xf32>
      %39 = math.log %38 : vector<8x1xf32>
      %40 = arith.addf %37, %39 : vector<8x1xf32>
      %c0_25 = arith.constant 0 : index
      %c0_26 = arith.constant 0 : index
      %41 = vector.load %arg8[%c0_25, %c0_26] : memref<8x1xf32, #tpu.memory_space<vmem>>, vector<8x1xf32>
      %42 = arith.subf %40, %41 : vector<8x1xf32>
      %c0_27 = arith.constant 0 : index
      %c0_28 = arith.constant 0 : index
      %43 = vector.load %arg4[%c0_27, %c0_28] : memref<8x1xf32, #tpu.memory_space<vmem>>, vector<8x1xf32>
      %44 = arith.mulf %42, %43 : vector<8x1xf32>
      %c0_29 = arith.constant 0 : index
      %c0_30 = arith.constant 0 : index
      %45 = vector.load %arg5[%c0_29, %c0_30] : memref<8x1xf32, #tpu.memory_space<vmem>>, vector<8x1xf32>
      tpu.vector_store %arg5[%c0_29, %c0_30], %44 {strides = array<i32>} : memref<8x1xf32, #tpu.memory_space<vmem>>, vector<8x1xf32>,
    } else {
    }
    return
  }
  func.func @transform_0(%arg0: i32, %arg1: i32) -> (i32, i32) {
    %c0_i32 = arith.constant 0 : i32
    return %arg0, %arg1 : i32, i32
  }
  func.func @transform_1(%arg0: i32, %arg1: i32) -> (i32, i32) {
    %c0_i32 = arith.constant 0 : i32
    %c0_i32_0 = arith.constant 0 : i32
    return %arg0, %c0_i32 : i32, i32
  }
  func.func @transform_2(%arg0: i32, %arg1: i32) -> (i32, i32) {
    %c0_i32 = arith.constant 0 : i32
    %c0_i32_0 = arith.constant 0 : i32
    return %arg0, %c0_i32 : i32, i32
  }
  func.func @transform_3(%arg0: i32, %arg1: i32) -> (i32, i32) {
    %c0_i32 = arith.constant 0 : i32
    %c0_i32_0 = arith.constant 0 : i32
    return %arg0, %c0_i32 : i32, i32
  }
}

</mosaic_0001>

<llo_original>
// kernel: _ce_pallas.1
$region0: #{_ce_pallas.1}
  #allocation0 [shape = 'u32[]', space=smem, size = 0x4, offset = 0x4, fixed_abs, tag = 'smem constant byte address 0x4 - core index']
  #allocation1 [shape = 'u32[144,128]{1,0:T(1,128)}', space=vmem, size = 0x12000, scoped, tag = 'internal scratch']
  #allocation2 [shape = 'f32[8,1]{1,0:T(8,128)}', space=vmem, size = 0x1000, scoped, tag = 'scratch operand']
  #allocation3 [shape = 'f32[8,1]{1,0:T(8,128)}', space=vmem, size = 0x1000, scoped, tag = 'scratch operand']
  #allocation4 [shape = 'f32[8,1]{1,0:T(8,128)}', space=vmem, size = 0x1000, scoped, tag = 'scratch operand']
  %s0 = inlined_call_operand.vmem [shape: f32[8,32], index: 0, kind: input, shape index: {}]
  %s1 = inlined_call_operand.vmem [shape: s32[8,1], index: 1, kind: input, shape index: {}]
  %s2 = inlined_call_operand.vmem [shape: f32[8,1], index: 2, kind: input, shape index: {}]
  %s3 = inlined_call_operand.vmem [shape: f32[8,1], index: 3, kind: output, shape index: {}]
  %s4 = sld [smem:[#allocation0]]
  $region30: #{_ce_pallas.1} parent=0
    _
  %s6 = ssub.s32 1, %s4
  %s7 = scalar_select 0, %s6, %s4
  // Predicated region
  $region2: #{_ce_pallas.1} parent=0 // pred_check
    _
  $region3: #{_ce_pallas.1} parent=0 // pred_check_branch
    %9 = sbr.rel (0) target = $region5
  $region4: #{_ce_pallas.1} parent=0 // pred_region
    _
  $region5: #{_ce_pallas.1} parent=0 // pred_fallthru
    _
  // Predicated region
  $region6: #{_ce_pallas.1} parent=0 // pred_check
    _
  $region7: #{_ce_pallas.1} parent=0 // pred_check_branch
    %11 = sbr.rel (0) target = $region9
  $region8: #{_ce_pallas.1} parent=0 // pred_region
    _
  $region9: #{_ce_pallas.1} parent=0 // pred_fallthru
    _
  // Predicated region
  $region10: #{_ce_pallas.1} parent=0 // pred_check
    _
  $region11: #{_ce_pallas.1} parent=0 // pred_check_branch
    %13 = sbr.rel (0) target = $region13
  $region12: #{_ce_pallas.1} parent=0 // pred_region
    _
  $region13: #{_ce_pallas.1} parent=0 // pred_fallthru
    _
  %p14 = scmp.eq.s32.totalorder 0, 0
  // Predicated region
  $region14: #{_ce_pallas.1} parent=0 // pred_check
    %p15 = pneg %p14
  $region15: #{_ce_pallas.1} parent=0 // pred_check_branch
    %17 = sbr.rel (%p15) target = $region17
  $region16: #{_ce_pallas.1} parent=0 // pred_region
    %vm18 = vcmask 7168
    %19 = vst.msk [vmem:[#allocation2] sm:$0xff] %vm18, -1e+30
    %20 = vst.msk [vmem:[#allocation3] sm:$0xff] %vm18, 0.0
    %21 = vst.msk [vmem:[#allocation4] sm:$0xff] %vm18, 0.0
  $region17: #{_ce_pallas.1} parent=0 // pred_fallthru
    _
  %v22 = vld [vmem:[%s0] sm:$0xff]
  %v23 = vlaneseq
  %v24 = vand.u32 %v23, 127
  %v25 = vld [vmem:[#allocation2] sm:$0xff]
  %vm26 = vcmask 261120
  %v27 = vsel %vm26, %v22, -inf
  %28 = vmax.xlane.f32.xlu0 %v27
  %v29 = vpop.xlane.xlu0 %28
  %v30 = vmax.f32 %v25, %v29
  %v31 = vsub.f32 %v25, %v30
  %v32 = vmul.f32 %v31, 1.442695
  %v33 = vpow.pop %v32
  %v34 = vld [vmem:[#allocation3] sm:$0xff]
  %v35 = vmul.f32 %v33, %v34
  %37 = vset.pattern.permute.xlu0 0
  %38 = vperm.xlu0 %37, %v30
  %v39 = vpop.permute.xlu0 %38
  %v41 = vsub.f32 %v22, %v39
  %v42 = vmul.f32 %v41, 1.442695
  %v43 = vpow.pop %v42
  %v44 = vsel %vm26, %v43, 0.0
  %45 = vadd.xlane.f32.xlu0 %v44
  %v46 = vpop.xlane.xlu0 %45
  %v47 = vadd.f32 %v35, %v46
  %vm48 = vcmask 7168
  %49 = vst.msk [vmem:[#allocation3] sm:$0xff] %vm48, %v47
  %50 = vst.msk [vmem:[#allocation2] sm:$0xff] %vm48, %v30
  %v51 = vld [vmem:[%s1] sm:$0xff]
  %s52 = smul.u32 0, 32
  %v53 = vstv %s52
  %v54 = vsub.s32 %v51, %v53
  %v55 = vld [vmem:[#allocation4] sm:$0xff]
  %56 = vset.pattern.permute.xlu0 0
  %57 = vperm.xlu0 %56, %v54
  %v58 = vpop.permute.xlu0 %57
  %vm59 = vcmp.eq.s32.totalorder %v24, %v58
  %v60 = vsel %vm59, %v22, 0.0
  %v61 = vsel %vm26, %v60, 0.0
  %62 = vadd.xlane.f32.xlu0 %v61
  %v63 = vpop.xlane.xlu0 %62
  %v64 = vadd.f32 %v55, %v63
  %65 = vst.msk [vmem:[#allocation4] sm:$0xff] %vm48, %v64
  // Predicated region
  $region18: #{_ce_pallas.1} parent=0 // pred_check
    %p66 = pneg %p14
  $region19: #{_ce_pallas.1} parent=0 // pred_check_branch
    %68 = sbr.rel (%p66) target = $region21
  $region20: #{_ce_pallas.1} parent=0 // pred_region
    %v69 = vld [vmem:[#allocation2] sm:$0xff]
    %v70 = vld [vmem:[#allocation3] sm:$0xff]
    %v71 = vlog2.pop %v70
    %v72 = vmul.f32 %v71, 0.6931472
    %v73 = vadd.f32 %v69, %v72
    %v74 = vld [vmem:[#allocation4] sm:$0xff]
    %v75 = vsub.f32 %v73, %v74
    %v76 = vld [vmem:[%s2] sm:$0xff]
    %v77 = vmul.f32 %v75, %v76
    %78 = vst.msk [vmem:[%s3] sm:$0xff] %vm48, %v77
  $region21: #{_ce_pallas.1} parent=0 // pred_fallthru
    _
  // Predicated region
  $region22: #{_ce_pallas.1} parent=0 // pred_check
    _
  $region23: #{_ce_pallas.1} parent=0 // pred_check_branch
    %80 = sbr.rel (0) target = $region25
  $region24: #{_ce_pallas.1} parent=0 // pred_region
    _
  $region25: #{_ce_pallas.1} parent=0 // pred_fallthru
    _
  // Predicated region
  $region26: #{_ce_pallas.1} parent=0 // pred_check
    _
  $region27: #{_ce_pallas.1} parent=0 // pred_check_branch
    %82 = sbr.rel (0) target = $region29
  $region28: #{_ce_pallas.1} parent=0 // pred_region
    _
  $region29: #{_ce_pallas.1} parent=0 // pred_fallthru
    _

</llo_original>
